<compile_context>
chip_gen: v5e
topology: v5e:2x2
jax: 0.10.0
libtpu: 0.0.40
codegen_flags: <defaults>
</compile_context>

<pallas_src>
import jax
import jax.numpy as jnp
from jax.experimental import pallas as pl
from jax.experimental.pallas import tpu as pltpu

_VMEM_BUDGET = 44 << 20     # stays safely under v7x's 64 MiB physical VMEM
_VMEM_SLACK = 2 << 20


def _mul_kernel(x_ref, m_ref, o_ref):
    # Dense path: x_ref / m_ref / o_ref are identically shaped (tT, tH) tiles.
    o_ref[...] = x_ref[...] * m_ref[...]


def _mul_bcast_kernel(x_ref, m_ref, o_ref):
    # Fallback path: x_ref/o_ref are (tT, B, H); m_ref is (tT, H).
    o_ref[...] = x_ref[...] * m_ref[...][:, None, :]


def _auto_tile_bytes():
    """Pick a per-step x-tile size from the TPU generation (HBM-BW driven)."""
    try:
        kind = jax.devices()[0].device_kind.lower()
    except Exception:
        return 4 << 20
    # <= v5 (~0.8-1.2 TB/s): ~3 MiB already keeps step overhead well under 5%.
    # v6e (~1.4 TB/s) and v7x (~3.2 TB/s, only 64 MiB VMEM): bigger tiles.
    if any(g in kind for g in ("v2", "v3", "v4", "v5")):
        return 3 << 20
    return 6 << 20


def _round_down(v, m):
    return max(m, (v // m) * m)


def locked_dropout(x, key, dropout=0.5, training=True, *, tile_bytes=None):
    """Forward pass of LockedDropout for x of shape (T, B, H)."""
    if not training or dropout == 0.0:
        return x

    T, B, H = x.shape
    keep_prob = 1.0 - float(dropout)

    # One draw per (t, h), locked across the batch; pre-scaled by 1/(1-p) so
    # the kernel is a single multiply per element (same-dtype scale matches
    # the PyTorch module's same-dtype division).
    keep = jax.random.bernoulli(key, keep_prob, (T, H))
    mask = jnp.where(keep, jnp.asarray(1.0 / keep_prob, x.dtype),
                     jnp.asarray(0, x.dtype))

    itemsize = jnp.dtype(x.dtype).itemsize
    pack = max(8, 32 // itemsize)            # sublane pack: f32=8, bf16=16, i8=32
    if tile_bytes is None:
        tile_bytes = _auto_tile_bytes()

    if H % 128 == 0:
        # ---------- dense path: view x as (T, B*H); fully lane/sublane dense.
        lane_budget = max(128, tile_bytes // (pack * itemsize))
        if H <= lane_budget:
            tH = H
        else:
            tH = 128
            for k in range(lane_budget // 128, 0, -1):
                if H % (k * 128) == 0:
                    tH = k * 128
                    break
        nHb = H // tH

        tT = tile_bytes // (tH * itemsize)
        tT = T if tT >= T else min(T, _round_down(tT, pack))
        # Megacore (v7x): make sure there are >= 2 grid steps to shard.
        if pl.cdiv(T, tT) * nHb * B < 2 and T >= 2 * pack:
            tT = _round_down(T // 2, pack)
        # Honest VMEM estimate: x in + out double-buffered + mask tile (2x).
        while 6 * tT * tH * itemsize + _VMEM_SLACK > _VMEM_BUDGET and tT > pack:
            tT = min(T, _round_down(tT // 2, pack))
        vmem_limit = int(min(_VMEM_BUDGET,
                             max(32 << 20, 6 * tT * tH * itemsize + _VMEM_SLACK)))

        x2 = x.reshape(T, B * H)
        out = pl.pallas_call(
            _mul_kernel,
            out_shape=jax.ShapeDtypeStruct((T, B * H), x.dtype),
            grid=(pl.cdiv(T, tT), nHb, B),
            in_specs=[
                pl.BlockSpec((tT, tH), lambda i, hi, b: (i, b * nHb + hi)),
                # Mask index is independent of b (innermost axis) -> each mask
                # tile is DMA'd once and reused across the whole batch.
                pl.BlockSpec((tT, tH), lambda i, hi, b: (i, hi)),
            ],
            out_specs=pl.BlockSpec((tT, tH), lambda i, hi, b: (i, b * nHb + hi)),
            compiler_params=pltpu.CompilerParams(
                dimension_semantics=("parallel", "parallel", "arbitrary"),
                vmem_limit_bytes=vmem_limit),
        )(x2, mask)
        return out.reshape(T, B, H)

    # ---------- fallback path (H not a multiple of 128): full-B / full-H
    # blocks are always layout-legal; broadcast the mask across batch in-kernel.
    # TODO(synk): when B < pack AND H % 128 != 0 the x tile carries padded
    # sublanes/lanes; padding H in the wrapper would trade extra HBM traffic
    # for lane density, which does not pay off on this bandwidth-bound op.
    b_pad = pl.cdiv(B, pack) * pack
    h_pad = pl.cdiv(H, 128) * 128
    row_bytes = b_pad * h_pad * itemsize          # padded bytes per t-row of x
    tT = tile_bytes // max(1, row_bytes)
    tT = T if tT >= T else min(T, _round_down(tT, pack))
    if pl.cdiv(T, tT) < 2 and T >= 2 * pack:
        tT = _round_down(T // 2, pack)

    def _est(t):
        x_blk = t * b_pad * h_pad * itemsize
        m_blk = max(t, pack) * h_pad * itemsize
        return 4 * x_blk + 2 * m_blk + _VMEM_SLACK

    while _est(tT) > _VMEM_BUDGET and tT > pack:
        tT = min(T, _round_down(tT // 2, pack))
    vmem_limit = int(min(_VMEM_BUDGET, max(32 << 20, _est(tT))))

    return pl.pallas_call(
        _mul_bcast_kernel,
        out_shape=jax.ShapeDtypeStruct((T, B, H), x.dtype),
        grid=(pl.cdiv(T, tT),),
        in_specs=[
            pl.BlockSpec((tT, B, H), lambda i: (i, 0, 0)),
            pl.BlockSpec((tT, H), lambda i: (i, 0)),
        ],
        out_specs=pl.BlockSpec((tT, B, H), lambda i: (i, 0, 0)),
        compiler_params=pltpu.CompilerParams(
            dimension_semantics=("parallel",),
            vmem_limit_bytes=vmem_limit),
    )(x, mask)


if __name__ == "__main__":
    root = jax.random.PRNGKey(0)
    kx, kmask, kx2, kmask2 = jax.random.split(root, 4)

    # --- small demo shape implied by the module: (seq=8, batch=2, hidden=32) ---
    T, B, H = 8, 2, 32
    x = jax.random.normal(kx, (T, B, H), dtype=jnp.float32)
    out = jax.block_until_ready(locked_dropout(x, kmask, dropout=0.5,
                                               training=True))

    # Sanity checks of LockedDropout semantics.
    assert out.shape == x.shape and out.dtype == x.dtype
    ratio = out / jnp.where(x == 0, 1.0, x)          # either 0 or 1/(1-p) = 2
    # Mask must be locked (identical) across the batch dimension.
    assert bool(jnp.allclose(ratio[:, 0, :], ratio[:, 1, :], atol=1e-5))
    # Values are either zeroed or scaled by exactly 1/(1-p).
    assert bool(jnp.all(jnp.isclose(ratio, 0.0, atol=1e-5)
                        | jnp.isclose(ratio, 2.0, atol=1e-5)))
    # Match a pure-JAX reference built from the same key.
    keep_ref = jax.random.bernoulli(kmask, 0.5, (T, H))
    ref = x * jnp.where(keep_ref, 2.0, 0.0)[:, None, :]
    assert bool(jnp.allclose(out, ref, atol=1e-6))
    # Eval mode is identity.
    out_eval = jax.block_until_ready(locked_dropout(x, kmask, dropout=0.5,
                                                    training=False))
    assert bool(jnp.array_equal(out_eval, x))

    # --- also exercise the lane-dense (H % 128 == 0) fast path ---
    T2, B2, H2 = 16, 2, 128
    x2 = jax.random.normal(kx2, (T2, B2, H2), dtype=jnp.float32)
    out2 = jax.block_until_ready(locked_dropout(x2, kmask2, dropout=0.25,
                                                training=True))
    keep_ref2 = jax.random.bernoulli(kmask2, 0.75, (T2, H2))
    scale2 = jnp.asarray(1.0 / 0.75, x2.dtype)
    ref2 = x2 * jnp.where(keep_ref2, scale2, 0.0).astype(x2.dtype)[:, None, :]
    assert out2.shape == x2.shape and out2.dtype == x2.dtype
    assert bool(jnp.allclose(out2, ref2, atol=1e-6, rtol=1e-6))

    print("KERNEL_OK")
</pallas_src>

<mosaic_0001>
module attributes {stable_mosaic.version = 11 : i64} {
  func.func @_mul_bcast_kernel(%arg0: i32, %arg1: memref<8x2x32xf32, #tpu.memory_space<vmem>>, %arg2: memref<8x32xf32, #tpu.memory_space<vmem>>, %arg3: memref<8x2x32xf32, #tpu.memory_space<vmem>>) attributes {dimension_semantics = [#tpu.dimension_semantics<parallel>], iteration_bounds = array<i64: 1>, scalar_prefetch = 0 : i64, scratch_operands = 0 : i64, tpu.core_type = #tpu.core_type<tc>, window_params = [{transform_indices = @transform_0, window_bounds = array<i64: 8, 2, 32>}, {transform_indices = @transform_1, window_bounds = array<i64: 8, 32>}, {transform_indices = @transform_2, window_bounds = array<i64: 8, 2, 32>}]} {
    %c0 = arith.constant 0 : index
    %c0_0 = arith.constant 0 : index
    %c0_1 = arith.constant 0 : index
    %0 = vector.load %arg1[%c0, %c0_0, %c0_1] : memref<8x2x32xf32, #tpu.memory_space<vmem>>, vector<8x2x32xf32>
    %c0_2 = arith.constant 0 : index
    %c0_3 = arith.constant 0 : index
    %1 = vector.load %arg2[%c0_2, %c0_3] : memref<8x32xf32, #tpu.memory_space<vmem>>, vector<8x32xf32>
    %2 = vector.shape_cast %1 : vector<8x32xf32> to vector<8x1x32xf32>
    %3 = vector.broadcast %2 : vector<8x1x32xf32> to vector<8x2x32xf32>
    %4 = arith.mulf %0, %3 : vector<8x2x32xf32>
    %c0_4 = arith.constant 0 : index
    %c0_5 = arith.constant 0 : index
    %c0_6 = arith.constant 0 : index
    %5 = vector.load %arg3[%c0_4, %c0_5, %c0_6] : memref<8x2x32xf32, #tpu.memory_space<vmem>>, vector<8x2x32xf32>
    tpu.vector_store %arg3[%c0_4, %c0_5, %c0_6], %4 {strides = array<i32>} : memref<8x2x32xf32, #tpu.memory_space<vmem>>, vector<8x2x32xf32>,
    return
  }
  func.func @transform_0(%arg0: i32) -> (i32, i32, i32) {
    %c0_i32 = arith.constant 0 : i32
    %c0_i32_0 = arith.constant 0 : i32
    %c0_i32_1 = arith.constant 0 : i32
    return %arg0, %c0_i32, %c0_i32_0 : i32, i32, i32
  }
  func.func @transform_1(%arg0: i32) -> (i32, i32) {
    %c0_i32 = arith.constant 0 : i32
    %c0_i32_0 = arith.constant 0 : i32
    return %arg0, %c0_i32 : i32, i32
  }
  func.func @transform_2(%arg0: i32) -> (i32, i32, i32) {
    %c0_i32 = arith.constant 0 : i32
    %c0_i32_0 = arith.constant 0 : i32
    %c0_i32_1 = arith.constant 0 : i32
    return %arg0, %c0_i32, %c0_i32_0 : i32, i32, i32
  }
}

</mosaic_0001>

<llo_original>
// kernel: tpu_custom_call.1
$region0: #{tpu_custom_call.1}
  #allocation0 [shape = 'u32[]', space=smem, size = 0x4, offset = 0x4, fixed_abs, tag = 'smem constant byte address 0x4 - core index']
  #allocation1 [shape = 'u32[72,128]{1,0:T(1,128)}', space=vmem, size = 0x9000, scoped, tag = 'internal scratch']
  %s0 = inlined_call_operand.hbm [shape: f32[8,2,32], index: 0, kind: input, shape index: {}]
  %s1 = inlined_call_operand.hbm [shape: f32[8,32], index: 1, kind: input, shape index: {}]
  %s2 = inlined_call_operand.hbm [shape: f32[8,2,32], index: 2, kind: output, shape index: {}]
  %s3 = sld [smem:[#allocation0]]
  $region26: #{tpu_custom_call.1} parent=0
    _
  %s5 = ssub.s32 1, %s3
  %s6 = scalar_select 0, %s5, %s3
  $region1: #{tpu_custom_call.1} parent=0
    #allocation2 [shape = 'u8[8192]{0}', space=vmem, size = 0x2000, scoped, tag = 'input window, operand 0, single buffered']
    #allocation3 [shape = 's32[1]{0}', space=sflag, size = 0x4, scoped, tag = 'scoped memory for tpu_custom_call.1']
    #allocation4 [shape = 's32[1]{0}', space=sflag, size = 0x4, scoped, tag = 'scoped memory for tpu_custom_call.1']
    #allocation5 [shape = 'u8[4096]{0}', space=vmem, size = 0x1000, scoped, tag = 'input window, operand 1, single buffered']
    #allocation6 [shape = 's32[1]{0}', space=sflag, size = 0x4, scoped, tag = 'scoped memory for tpu_custom_call.1']
    #allocation7 [shape = 'u8[8192]{0}', space=vmem, size = 0x2000, scoped, tag = 'output window, operand 0, single buffered']
    %7 = vsyncpa [#allocation3], 0
    %8 = vsyncpa [#allocation6], 0
    %9 = vsyncpa [#allocation4], 0
    // Predicated region
    $region2: #{tpu_custom_call.1} parent=1 // pred_check
      _
    $region3: #{tpu_custom_call.1} parent=1 // pred_check_branch
      %11 = sbr.rel (0) target = $region5
    $region4: #{tpu_custom_call.1} parent=1 // pred_region
      %13 = vsyncadd [#allocation3], 0
      %s14 = sshll.u32 %s0, 4
      %s15 = int_to_ptr.hbm [resolvable:$true] %s14
      %s16 = sshll.u32 [#allocation2], 4
      %s17 = int_to_ptr.vmem [resolvable:$true] %s16
      %22 = dma.hbm_to_vmem [thread:$0]  %s15, 256, %s17, [#allocation3], 32, 32, 2
    $region5: #{tpu_custom_call.1} parent=1 // pred_fallthru
      _
    // Predicated region
    $region6: #{tpu_custom_call.1} parent=1 // pred_check
      _
    $region7: #{tpu_custom_call.1} parent=1 // pred_check_branch
      %24 = sbr.rel (0) target = $region9
    $region8: #{tpu_custom_call.1} parent=1 // pred_region
      %26 = vsyncadd [#allocation6], 0
      %s28 = sshll.u32 %s1, 4
      %s29 = int_to_ptr.hbm [resolvable:$true] %s28
      %s30 = sshll.u32 [#allocation5], 4
      %s31 = int_to_ptr.vmem [resolvable:$true] %s30
      %33 = dma.hbm_to_vmem [thread:$0]  %s29, 128, %s31, [#allocation6]
    $region9: #{tpu_custom_call.1} parent=1 // pred_fallthru
      _
    // Predicated region
    $region10: #{tpu_custom_call.1} parent=1 // pred_check
      _
    $region11: #{tpu_custom_call.1} parent=1 // pred_check_branch
      %35 = sbr.rel (0) target = $region13
    $region12: #{tpu_custom_call.1} parent=1 // pred_region
      %37 = dma.done [#allocation3], 256
    $region13: #{tpu_custom_call.1} parent=1 // pred_fallthru
      _
    // Predicated region
    $region14: #{tpu_custom_call.1} parent=1 // pred_check
      _
    $region15: #{tpu_custom_call.1} parent=1 // pred_check_branch
      %39 = sbr.rel (0) target = $region17
    $region16: #{tpu_custom_call.1} parent=1 // pred_region
      %41 = dma.done [#allocation6], 128
    $region17: #{tpu_custom_call.1} parent=1 // pred_fallthru
      _
    %v42 = vld [vmem:[#allocation2] sm:$0x3]
    %v43 = vld [vmem:[#allocation2 + $0x2] sm:$0x3]
    %v44 = vld [vmem:[#allocation2 + $0x4] sm:$0x3]
    %v45 = vld [vmem:[#allocation2 + $0x6] sm:$0x3]
    %v46 = vld [vmem:[#allocation2 + $0x8] sm:$0x3]
    %v47 = vld [vmem:[#allocation2 + $0xa] sm:$0x3]
    %v48 = vld [vmem:[#allocation2 + $0xc] sm:$0x3]
    %v49 = vld [vmem:[#allocation2 + $0xe] sm:$0x3]
    %v50 = vld [vmem:[#allocation5] sm:$0xff]
    %v52 = vrot.slane %v50, 1
    %v53 = vrot.slane %v50, 2
    %v54 = vrot.slane %v50, 3
    %v55 = vrot.slane %v50, 4
    %v56 = vrot.slane %v50, 5
    %v57 = vrot.slane %v50, 6
    %v58 = vrot.slane %v50, 7
    %v59 = vperm.slane %v50, 0
    %v60 = vperm.slane %v52, 0
    %v61 = vperm.slane %v53, 0
    %v62 = vperm.slane %v54, 0
    %v63 = vperm.slane %v55, 0
    %v64 = vperm.slane %v56, 0
    %v65 = vperm.slane %v57, 0
    %v66 = vperm.slane %v58, 0
    %v75 = vmul.f32 %v42, %v59
    %v76 = vmul.f32 %v43, %v60
    %v77 = vmul.f32 %v44, %v61
    %v78 = vmul.f32 %v45, %v62
    %v79 = vmul.f32 %v46, %v63
    %v80 = vmul.f32 %v47, %v64
    %v81 = vmul.f32 %v48, %v65
    %v82 = vmul.f32 %v49, %v66
    %vm83 = vcmask 254976
    %84 = vst.msk [vmem:[#allocation7] sm:$0x3] %vm83, %v75
    %85 = vst.msk [vmem:[#allocation7 + $0x2] sm:$0x3] %vm83, %v76
    %86 = vst.msk [vmem:[#allocation7 + $0x4] sm:$0x3] %vm83, %v77
    %87 = vst.msk [vmem:[#allocation7 + $0x6] sm:$0x3] %vm83, %v78
    %88 = vst.msk [vmem:[#allocation7 + $0x8] sm:$0x3] %vm83, %v79
    %89 = vst.msk [vmem:[#allocation7 + $0xa] sm:$0x3] %vm83, %v80
    %90 = vst.msk [vmem:[#allocation7 + $0xc] sm:$0x3] %vm83, %v81
    %91 = vst.msk [vmem:[#allocation7 + $0xe] sm:$0x3] %vm83, %v82
    // Predicated region
    $region18: #{tpu_custom_call.1} parent=1 // pred_check
      _
    $region19: #{tpu_custom_call.1} parent=1 // pred_check_branch
      %93 = sbr.rel (0) target = $region21
    $region20: #{tpu_custom_call.1} parent=1 // pred_region
      %95 = vsyncadd [#allocation4], 0
      %s96 = sshll.u32 [#allocation7], 4
      %s97 = int_to_ptr.vmem [resolvable:$true] %s96
      %s98 = sshll.u32 %s2, 4
      %s99 = int_to_ptr.hbm [resolvable:$true] %s98
      %104 = dma.vmem_to_hbm [thread:$0]  %s97, 256, %s99, [#allocation4], 32, 32, 2
    $region21: #{tpu_custom_call.1} parent=1 // pred_fallthru
      _
    // Predicated region
    $region22: #{tpu_custom_call.1} parent=1 // pred_check
      _
    $region23: #{tpu_custom_call.1} parent=1 // pred_check_branch
      %106 = sbr.rel (0) target = $region25
    $region24: #{tpu_custom_call.1} parent=1 // pred_region
      %108 = dma.done [#allocation4], 256
    $region25: #{tpu_custom_call.1} parent=1 // pred_fallthru
      _
    %109 = vsyncpa [#allocation3], 1
    %110 = vsyncpa [#allocation6], 1
    %111 = vsyncpa [#allocation4], 1

</llo_original>
